<compile_context>
chip_gen: v7x
topology: tpu7x:2x2x1
jax: 0.10.0
libtpu: 0.0.40
codegen_flags: <defaults>
</compile_context>

<pallas_src>
import functools

import jax
import jax.numpy as jnp
from jax.experimental import pallas as pl
from jax.experimental.pallas import tpu as pltpu


def _round_up(x, m):
    return (x + m - 1) // m * m


def _spline_basis_term(t, k, degree, knots):
    """k-th truncated-power basis function (reference path)."""
    if k == 0:
        return jnp.ones_like(t)
    if k <= degree:
        return t ** k
    knot = knots[k - degree - 1]
    return jnp.maximum(t - knot, 0.0) ** degree


def ratio_head_kernel(t_ref, feat_ref, w_ref, b_ref, out_ref, *,
                      num_shifts, degree, knots, telescope):
    # t_ref:    (Tr, TB) treatment, Tr in {1, S} (1 => broadcast over shifts)
    # feat_ref: (D, TB)  features, batch on the lane axis
    # w_ref:    (K*S, D) fused per-basis/per-shift weights (row = k*S + s)
    # b_ref:    (K*S, 1) fused biases
    # out_ref:  (S, TB)  log ratios (transposed; wrapper transposes back)
    S = num_shifts
    num_basis = degree + 1 + len(knots)

    t = t_ref[...].astype(jnp.float32)
    feat = feat_ref[...]
    w = w_ref[...]
    b = b_ref[...]

    # Single fused MXU matmul covering all K basis terms and all S shifts.
    fw = jnp.dot(w, feat, preferred_element_type=jnp.float32)      # (K*S, TB)

    # Truncated-power spline basis with hoisted powers of t (VPU, f32).
    pows = [jnp.ones_like(t)]
    for _ in range(degree):
        pows.append(pows[-1] * t)
    basis = list(pows)                                              # 1, t, ..., t^deg
    for knot in knots:
        r = jnp.maximum(t - knot, 0.0)
        rk = r
        for _ in range(degree - 1):
            rk = rk * r                                             # relu(t-knot)^deg
        basis.append(rk)

    acc = jnp.zeros((S, t.shape[1]), dtype=jnp.float32)
    for k in range(num_basis):
        slab = fw[k * S:(k + 1) * S, :] + b[k * S:(k + 1) * S, :]   # (S, TB)
        acc = acc + basis[k] * slab

    log_ratio = 0.5 * acc
    log_ratio = 3.0 * jnp.tanh(jnp.clip(log_ratio, -3.0, 3.0))

    if telescope:
        # cumsum over the shift (sublane) axis as an unrolled chain of adds.
        rows = [log_ratio[0:1, :]]
        for s in range(1, S):
            rows.append(rows[-1] + log_ratio[s:s + 1, :])
        log_ratio = jnp.concatenate(rows, axis=0)

    out_ref[...] = log_ratio.astype(out_ref.dtype)


def ratio_head_forward(treatment, features, weight, bias, *,
                       degree=2, knots=(0.33, 0.66),
                       ratio_loss="classifier",
                       matmul_dtype=jnp.float32,
                       batch_tile=512):
    """Pallas-backed RatioHead forward (classifier / telescope).

    treatment: (B,) or (B, S)
    features : (B, D)
    weight   : (S, D, K) per-shift VCLinear weights (out_dim == 1)
    bias     : (S, K)    per-shift VCLinear biases  (out_dim == 1)
    returns  : (B, S) float32 log ratios
    """
    assert ratio_loss in ("classifier", "telescope")
    S, D, K = weight.shape
    assert K == degree + 1 + len(knots)
    B = features.shape[0]

    treatment = jnp.asarray(treatment, jnp.float32)
    features = jnp.asarray(features, jnp.float32)
    weight = jnp.asarray(weight, jnp.float32)
    bias = jnp.asarray(bias, jnp.float32)

    # Lane-dense (batch-on-lanes) layouts.
    if treatment.ndim == 1:
        t_sb = treatment[None, :]                                   # (1, B)
    else:
        t_sb = jnp.transpose(treatment, (1, 0))                     # (S, B)
    feat_db = jnp.transpose(features, (1, 0))                       # (D, B)
    w_fused = jnp.transpose(weight, (2, 0, 1)).reshape(K * S, D)    # row = k*S+s
    b_fused = jnp.transpose(bias, (1, 0)).reshape(K * S, 1)

    # Batch tiling: pad B to a multiple of 128 and pick a 128-multiple tile
    # that divides it (small tiles stay well under the v7x 64 MiB VMEM budget).
    padded_b = _round_up(B, 128)
    tb = 128
    for cand in (min(_round_up(batch_tile, 128), 1024), 512, 256):
        if cand <= padded_b and padded_b % cand == 0:
            tb = cand
            break
    if padded_b != B:
        pad = padded_b - B
        t_sb = jnp.pad(t_sb, ((0, 0), (0, pad)))
        feat_db = jnp.pad(feat_db, ((0, 0), (0, pad)))

    feat_db = feat_db.astype(matmul_dtype)
    w_fused = w_fused.astype(matmul_dtype)
    t_rows = t_sb.shape[0]

    kernel = functools.partial(
        ratio_head_kernel,
        num_shifts=S,
        degree=degree,
        knots=tuple(float(k) for k in knots),
        telescope=(ratio_loss == "telescope"),
    )

    out_sb = pl.pallas_call(
        kernel,
        out_shape=jax.ShapeDtypeStruct((S, padded_b), jnp.float32),
        grid_spec=pltpu.PrefetchScalarGridSpec(
            num_scalar_prefetch=0,
            grid=(padded_b // tb,),
            in_specs=[
                pl.BlockSpec((t_rows, tb), lambda i: (0, i)),       # treatment
                pl.BlockSpec((D, tb), lambda i: (0, i)),            # features
                pl.BlockSpec((K * S, D), lambda i: (0, 0)),         # weights (resident)
                pl.BlockSpec((K * S, 1), lambda i: (0, 0)),         # biases  (resident)
            ],
            out_specs=pl.BlockSpec((S, tb), lambda i: (0, i)),
        ),
        compiler_params=pltpu.CompilerParams(
            dimension_semantics=("parallel",)),
    )(t_sb, feat_db, w_fused, b_fused)

    return jnp.transpose(out_sb[:, :B], (1, 0))                     # (B, S)


def ratio_head_reference(treatment, features, weight, bias, *,
                         degree=2, knots=(0.33, 0.66), ratio_loss="classifier"):
    """Pure-JAX reference mirroring the PyTorch module."""
    num_shifts = weight.shape[0]
    B, D = features.shape
    if treatment.ndim == 1:
        treatment = jnp.broadcast_to(treatment[:, None], (B, num_shifts))
    num_basis = degree + 1 + len(knots)
    cols = []
    for i in range(num_shifts):
        t = treatment[:, i]
        basis = jnp.stack(
            [_spline_basis_term(t, k, degree, knots) for k in range(num_basis)],
            axis=1)                                                 # (B, K)
        fw = features @ weight[i]                                   # (B, K)
        cols.append(jnp.sum(basis * (fw + bias[i][None, :]), axis=1))
    log_ratio = 0.5 * jnp.stack(cols, axis=1)
    log_ratio = 3.0 * jnp.tanh(jnp.clip(log_ratio, -3.0, 3.0))
    if ratio_loss == "telescope":
        log_ratio = jnp.cumsum(log_ratio, axis=1)
    return log_ratio


if __name__ == "__main__":
    key = jax.random.PRNGKey(0)
    k_t, k_f, k_w, k_b = jax.random.split(key, 4)

    # Small shapes consistent with the module.
    B, D = 8, 32                       # batch, in_dim (feature dim)
    shift_values = [0.1, 0.2, 0.3, 0.4]
    S = len(shift_values)
    degree = 2
    knots = (0.33, 0.66)
    K = degree + 1 + len(knots)        # spline basis dim = 5

    treatment = jax.random.uniform(k_t, (B,), dtype=jnp.float32)
    features = 0.5 * jax.random.normal(k_f, (B, D), dtype=jnp.float32)
    weight = 0.1 * jax.random.normal(k_w, (S, D, K), dtype=jnp.float32)
    bias = 0.1 * jax.random.normal(k_b, (S, K), dtype=jnp.float32)

    # f32 path: classifier + telescope, strict tolerance.
    for mode in ("classifier", "telescope"):
        out = jax.block_until_ready(
            ratio_head_forward(treatment, features, weight, bias,
                               degree=degree, knots=knots, ratio_loss=mode))
        ref = ratio_head_reference(treatment, features, weight, bias,
                                   degree=degree, knots=knots, ratio_loss=mode)
        assert out.shape == (B, S)
        assert jnp.allclose(out, ref, atol=2e-5, rtol=2e-5), (mode, out, ref)

    # 2-D treatment + batch size exercising lane padding (200 -> 256).
    B2 = 200
    k_t2, k_f2 = jax.random.split(k_t)
    treatment2 = jax.random.uniform(k_t2, (B2, S), dtype=jnp.float32)
    features2 = 0.5 * jax.random.normal(k_f2, (B2, D), dtype=jnp.float32)
    out2 = jax.block_until_ready(
        ratio_head_forward(treatment2, features2, weight, bias,
                           degree=degree, knots=knots, ratio_loss="classifier"))
    ref2 = ratio_head_reference(treatment2, features2, weight, bias,
                                degree=degree, knots=knots,
                                ratio_loss="classifier")
    assert out2.shape == (B2, S)
    assert jnp.allclose(out2, ref2, atol=2e-5, rtol=2e-5)

    # bf16 matmul-operand path (bandwidth optimization), looser tolerance.
    out_bf16 = jax.block_until_ready(
        ratio_head_forward(treatment, features, weight, bias,
                           degree=degree, knots=knots, ratio_loss="classifier",
                           matmul_dtype=jnp.bfloat16))
    ref_f32 = ratio_head_reference(treatment, features, weight, bias,
                                   degree=degree, knots=knots,
                                   ratio_loss="classifier")
    assert jnp.allclose(out_bf16, ref_f32, atol=5e-2, rtol=5e-2)

    print("KERNEL_OK")
</pallas_src>

<mosaic_0001>
module attributes {stable_mosaic.version = 11 : i64} {
  func.func @ratio_head_kernel(%arg0: i32, %arg1: memref<1x128xf32, #tpu.memory_space<vmem>>, %arg2: memref<32x128xf32, #tpu.memory_space<vmem>>, %arg3: memref<20x32xf32, #tpu.memory_space<vmem>>, %arg4: memref<20x1xf32, #tpu.memory_space<vmem>>, %arg5: memref<4x128xf32, #tpu.memory_space<vmem>>) attributes {dimension_semantics = [#tpu.dimension_semantics<parallel>], iteration_bounds = array<i64: 1>, scalar_prefetch = 0 : i64, scratch_operands = 0 : i64, tpu.core_type = #tpu.core_type<tc>, window_params = [{transform_indices = @transform_0, window_bounds = array<i64: 1, 128>}, {transform_indices = @transform_1, window_bounds = array<i64: 32, 128>}, {pipeline_mode = #tpu.pipeline_mode<synchronous>, transform_indices = @transform_2, window_bounds = array<i64: 20, 32>}, {pipeline_mode = #tpu.pipeline_mode<synchronous>, transform_indices = @transform_3, window_bounds = array<i64: 20, 1>}, {transform_indices = @transform_4, window_bounds = array<i64: 4, 128>}]} {
    %c0 = arith.constant 0 : index
    %c0_0 = arith.constant 0 : index
    %0 = vector.load %arg1[%c0, %c0_0] : memref<1x128xf32, #tpu.memory_space<vmem>>, vector<1x128xf32>
    %c0_1 = arith.constant 0 : index
    %c0_2 = arith.constant 0 : index
    %1 = vector.load %arg2[%c0_1, %c0_2] : memref<32x128xf32, #tpu.memory_space<vmem>>, vector<32x128xf32>
    %c0_3 = arith.constant 0 : index
    %c0_4 = arith.constant 0 : index
    %2 = vector.load %arg3[%c0_3, %c0_4] : memref<20x32xf32, #tpu.memory_space<vmem>>, vector<20x32xf32>
    %c0_5 = arith.constant 0 : index
    %c0_6 = arith.constant 0 : index
    %3 = vector.load %arg4[%c0_5, %c0_6] : memref<20x1xf32, #tpu.memory_space<vmem>>, vector<20x1xf32>
    %cst = arith.constant dense<0.000000e+00> : vector<20x128xf32>
    %4 = tpu.matmul %2, %1, %cst {dimension_numbers = #tpu.dot_dimension_numbers<[1], [0], [0], [1], [0, 0, 1, 1], [], []>} : vector<20x32xf32>, vector<32x128xf32>, vector<20x128xf32> -> vector<20x128xf32>
    %cst_7 = arith.constant 1.000000e+00 : f32
    %5 = vector.broadcast %cst_7 : f32 to vector<1x128xf32>
    %6 = arith.mulf %5, %0 : vector<1x128xf32>
    %7 = arith.mulf %6, %0 : vector<1x128xf32>
    %cst_8 = arith.constant 3.300000e-01 : f32
    %8 = vector.broadcast %cst_8 : f32 to vector<1x128xf32>
    %9 = arith.subf %0, %8 : vector<1x128xf32>
    %cst_9 = arith.constant 0.000000e+00 : f32
    %10 = vector.broadcast %cst_9 : f32 to vector<1x128xf32>
    %11 = arith.maximumf %9, %10 : vector<1x128xf32>
    %12 = arith.mulf %11, %11 : vector<1x128xf32>
    %cst_10 = arith.constant 6.600000e-01 : f32
    %13 = vector.broadcast %cst_10 : f32 to vector<1x128xf32>
    %14 = arith.subf %0, %13 : vector<1x128xf32>
    %cst_11 = arith.constant 0.000000e+00 : f32
    %15 = vector.broadcast %cst_11 : f32 to vector<1x128xf32>
    %16 = arith.maximumf %14, %15 : vector<1x128xf32>
    %17 = arith.mulf %16, %16 : vector<1x128xf32>
    %cst_12 = arith.constant 0.000000e+00 : f32
    %18 = vector.broadcast %cst_12 : f32 to vector<4x128xf32>
    %19 = vector.extract_strided_slice %4 {offsets = [0, 0], sizes = [4, 128], strides = [1, 1]} : vector<20x128xf32> to vector<4x128xf32>
    %20 = vector.extract_strided_slice %3 {offsets = [0, 0], sizes = [4, 1], strides = [1, 1]} : vector<20x1xf32> to vector<4x1xf32>
    %21 = vector.broadcast %20 : vector<4x1xf32> to vector<4x128xf32>
    %22 = arith.addf %19, %21 : vector<4x128xf32>
    %23 = vector.broadcast %5 : vector<1x128xf32> to vector<4x128xf32>
    %24 = arith.mulf %23, %22 : vector<4x128xf32>
    %25 = arith.addf %18, %24 : vector<4x128xf32>
    %26 = vector.extract_strided_slice %4 {offsets = [4, 0], sizes = [4, 128], strides = [1, 1]} : vector<20x128xf32> to vector<4x128xf32>
    %27 = vector.extract_strided_slice %3 {offsets = [4, 0], sizes = [4, 1], strides = [1, 1]} : vector<20x1xf32> to vector<4x1xf32>
    %28 = vector.broadcast %27 : vector<4x1xf32> to vector<4x128xf32>
    %29 = arith.addf %26, %28 : vector<4x128xf32>
    %30 = vector.broadcast %6 : vector<1x128xf32> to vector<4x128xf32>
    %31 = arith.mulf %30, %29 : vector<4x128xf32>
    %32 = arith.addf %25, %31 : vector<4x128xf32>
    %33 = vector.extract_strided_slice %4 {offsets = [8, 0], sizes = [4, 128], strides = [1, 1]} : vector<20x128xf32> to vector<4x128xf32>
    %34 = vector.extract_strided_slice %3 {offsets = [8, 0], sizes = [4, 1], strides = [1, 1]} : vector<20x1xf32> to vector<4x1xf32>
    %35 = vector.broadcast %34 : vector<4x1xf32> to vector<4x128xf32>
    %36 = arith.addf %33, %35 : vector<4x128xf32>
    %37 = vector.broadcast %7 : vector<1x128xf32> to vector<4x128xf32>
    %38 = arith.mulf %37, %36 : vector<4x128xf32>
    %39 = arith.addf %32, %38 : vector<4x128xf32>
    %40 = vector.extract_strided_slice %4 {offsets = [12, 0], sizes = [4, 128], strides = [1, 1]} : vector<20x128xf32> to vector<4x128xf32>
    %41 = vector.extract_strided_slice %3 {offsets = [12, 0], sizes = [4, 1], strides = [1, 1]} : vector<20x1xf32> to vector<4x1xf32>
    %42 = vector.broadcast %41 : vector<4x1xf32> to vector<4x128xf32>
    %43 = arith.addf %40, %42 : vector<4x128xf32>
    %44 = vector.broadcast %12 : vector<1x128xf32> to vector<4x128xf32>
    %45 = arith.mulf %44, %43 : vector<4x128xf32>
    %46 = arith.addf %39, %45 : vector<4x128xf32>
    %47 = vector.extract_strided_slice %4 {offsets = [16, 0], sizes = [4, 128], strides = [1, 1]} : vector<20x128xf32> to vector<4x128xf32>
    %48 = vector.extract_strided_slice %3 {offsets = [16, 0], sizes = [4, 1], strides = [1, 1]} : vector<20x1xf32> to vector<4x1xf32>
    %49 = vector.broadcast %48 : vector<4x1xf32> to vector<4x128xf32>
    %50 = arith.addf %47, %49 : vector<4x128xf32>
    %51 = vector.broadcast %17 : vector<1x128xf32> to vector<4x128xf32>
    %52 = arith.mulf %51, %50 : vector<4x128xf32>
    %53 = arith.addf %46, %52 : vector<4x128xf32>
    %cst_13 = arith.constant 5.000000e-01 : f32
    %54 = vector.broadcast %cst_13 : f32 to vector<4x128xf32>
    %55 = arith.mulf %54, %53 : vector<4x128xf32>
    %cst_14 = arith.constant -3.000000e+00 : f32
    %cst_15 = arith.constant 3.000000e+00 : f32
    %56 = vector.broadcast %cst_14 : f32 to vector<4x128xf32>
    %57 = arith.maximumf %56, %55 : vector<4x128xf32>
    %58 = vector.broadcast %cst_15 : f32 to vector<4x128xf32>
    %59 = arith.minimumf %58, %57 : vector<4x128xf32>
    %60 = math.tanh %59 : vector<4x128xf32>
    %cst_16 = arith.constant 3.000000e+00 : f32
    %61 = vector.broadcast %cst_16 : f32 to vector<4x128xf32>
    %62 = arith.mulf %61, %60 : vector<4x128xf32>
    %c0_17 = arith.constant 0 : index
    %c0_18 = arith.constant 0 : index
    %63 = vector.load %arg5[%c0_17, %c0_18] : memref<4x128xf32, #tpu.memory_space<vmem>>, vector<4x128xf32>
    tpu.vector_store %arg5[%c0_17, %c0_18], %62 {strides = array<i32>} : memref<4x128xf32, #tpu.memory_space<vmem>>, vector<4x128xf32>,
    return
  }
  func.func @transform_0(%arg0: i32) -> (i32, i32) {
    %c0_i32 = arith.constant 0 : i32
    %c0_i32_0 = arith.constant 0 : i32
    return %c0_i32, %arg0 : i32, i32
  }
  func.func @transform_1(%arg0: i32) -> (i32, i32) {
    %c0_i32 = arith.constant 0 : i32
    %c0_i32_0 = arith.constant 0 : i32
    return %c0_i32, %arg0 : i32, i32
  }
  func.func @transform_2(%arg0: i32) -> (i32, i32) {
    %c0_i32 = arith.constant 0 : i32
    %c0_i32_0 = arith.constant 0 : i32
    %c0_i32_1 = arith.constant 0 : i32
    return %c0_i32, %c0_i32_0 : i32, i32
  }
  func.func @transform_3(%arg0: i32) -> (i32, i32) {
    %c0_i32 = arith.constant 0 : i32
    %c0_i32_0 = arith.constant 0 : i32
    %c0_i32_1 = arith.constant 0 : i32
    return %c0_i32, %c0_i32_0 : i32, i32
  }
  func.func @transform_4(%arg0: i32) -> (i32, i32) {
    %c0_i32 = arith.constant 0 : i32
    %c0_i32_0 = arith.constant 0 : i32
    return %c0_i32, %arg0 : i32, i32
  }
}

</mosaic_0001>

<llo_original>
// kernel: tpu_custom_call.1
$region0: #{tpu_custom_call.1}
  #allocation0 [shape = 'u32[]', space=smem, size = 0x4, offset = 0x4, fixed_abs, tag = 'smem constant byte address 0x4 - core index']
  #allocation1 [shape = 'u32[144,128]{1,0:T(1,128)}', space=vmem, size = 0x12000, scoped, tag = 'internal scratch']
  %s0 = inlined_call_operand.vmem [shape: f32[1,128], index: 0, kind: input, shape index: {}]
  %s1 = inlined_call_operand.hbm [shape: f32[32,128], index: 1, kind: input, shape index: {}]
  %s2 = inlined_call_operand.vmem [shape: f32[20,32], index: 2, kind: input, shape index: {}]
  %s3 = inlined_call_operand.vmem [shape: f32[20,1], index: 3, kind: input, shape index: {}]
  %s4 = inlined_call_operand.hbm [shape: f32[4,128], index: 4, kind: output, shape index: {}]
  %s5 = sld [smem:[#allocation0]]
  $region30: #{tpu_custom_call.1} parent=0
    _
  %s7 = ssub.s32 1, %s5
  %s8 = scalar_select 0, %s7, %s5
  $region1: #{tpu_custom_call.1} parent=0
    #allocation2 [shape = 'u8[16384]{0}', space=vmem, size = 0x4000, scoped, tag = 'input window, operand 1, single buffered']
    #allocation3 [shape = 's32[1]{0}', space=sflag, size = 0x4, scoped, tag = 'scoped memory for tpu_custom_call.1']
    #allocation4 [shape = 's32[1]{0}', space=sflag, size = 0x4, scoped, tag = 'scoped memory for tpu_custom_call.1']
    #allocation5 [shape = 'u8[2048]{0}', space=vmem, size = 0x800, scoped, tag = 'output window, operand 0, single buffered']
    %9 = vsyncpa [#allocation3], 0
    %10 = vsyncpa [#allocation4], 0
    // Predicated region
    $region2: #{tpu_custom_call.1} parent=1 // pred_check
      _
    $region3: #{tpu_custom_call.1} parent=1 // pred_check_branch
      %12 = sbr.rel (0) target = $region5
    $region4: #{tpu_custom_call.1} parent=1 // pred_region
      _
    $region5: #{tpu_custom_call.1} parent=1 // pred_fallthru
      _
    // Predicated region
    $region6: #{tpu_custom_call.1} parent=1 // pred_check
      _
    $region7: #{tpu_custom_call.1} parent=1 // pred_check_branch
      %14 = sbr.rel (0) target = $region9
    $region8: #{tpu_custom_call.1} parent=1 // pred_region
      %s16 = ssub.s32 512, 512
      %17 = vsyncadd [#allocation3], %s16
      %s18 = sshll.u32 [#allocation2], 4
      %s19 = int_to_ptr.vmem [resolvable:$true] %s18
      %24 = dma.hbm_to_vmem [thread:$0]  %s1, 512, %s19, [#allocation3], 128, 128, 8
    $region9: #{tpu_custom_call.1} parent=1 // pred_fallthru
      _
    // Predicated region
    $region10: #{tpu_custom_call.1} parent=1 // pred_check
      _
    $region11: #{tpu_custom_call.1} parent=1 // pred_check_branch
      %26 = sbr.rel (0) target = $region13
    $region12: #{tpu_custom_call.1} parent=1 // pred_region
      _
    $region13: #{tpu_custom_call.1} parent=1 // pred_fallthru
      _
    // Predicated region
    $region14: #{tpu_custom_call.1} parent=1 // pred_check
      _
    $region15: #{tpu_custom_call.1} parent=1 // pred_check_branch
      %28 = sbr.rel (0) target = $region17
    $region16: #{tpu_custom_call.1} parent=1 // pred_region
      _
    $region17: #{tpu_custom_call.1} parent=1 // pred_fallthru
      _
    // Predicated region
    $region18: #{tpu_custom_call.1} parent=1 // pred_check
      _
    $region19: #{tpu_custom_call.1} parent=1 // pred_check_branch
      %30 = sbr.rel (0) target = $region21
    $region20: #{tpu_custom_call.1} parent=1 // pred_region
      %31 = dma.done [#allocation3], 512
    $region21: #{tpu_custom_call.1} parent=1 // pred_fallthru
      _
    %v32 = vld [vmem:[%s0] sm:$0x1]
    %v33 = vld [vmem:[#allocation2] sm:$0xff]
    %v34 = vld [vmem:[#allocation2 + $0x8] sm:$0xff]
    %v35 = vld [vmem:[#allocation2 + $0x10] sm:$0xff]
    %v36 = vld [vmem:[#allocation2 + $0x18] sm:$0xff]
    %v37 = vld [vmem:[%s2] sm:$0xff]
    %v38 = vld [vmem:[%s2 + $0x8] sm:$0xff]
    %v39 = vld [vmem:[%s2 + $0x10] sm:$0xf]
    %v40 = vld [vmem:[%s3] sm:$0xff]
    %v41 = vld [vmem:[%s3 + $0x8] sm:$0xff]
    %v42 = vld [vmem:[%s3 + $0x10] sm:$0xf]
    %vm43 = vcmask 261120
    %v45 = vsel %vm43, %v37, 0
    %v48 = vsel %vm43, %v38, 0
    %v51 = vsel %vm43, %v39, 0
    %53 = vmatprep.subr.mxu0 0.0
    %54 = vmatpush1.msra.mxu0 %v33
    %55 = vmatprep.subr.mxu0 0.0
    %56 = vmatpush1.msra.mxu0 %v34
    %57 = vmatprep.subr.mxu0 0.0
    %58 = vmatpush1.msra.mxu0 %v35
    %59 = vmatprep.subr.mxu0 0.0
    %60 = vmatpush1.msra.mxu0 %v36
    %61 = vmatprep.subr.mxu0 0.0
    %62 = vmatpush1.msra.mxu0 0.0
    %63 = vmatprep.subr.mxu0 0.0
    %64 = vmatpush1.msra.mxu0 0.0
    %65 = vmatprep.subr.mxu0 0.0
    %66 = vmatpush1.msra.mxu0 0.0
    %67 = vmatprep.subr.mxu0 0.0
    %68 = vmatpush1.msra.mxu0 0.0
    %69 = vmatprep.subr.mxu0 0.0
    %70 = vmatpush1.msra.mxu0 0.0
    %71 = vmatprep.subr.mxu0 0.0
    %72 = vmatpush1.msra.mxu0 0.0
    %73 = vmatprep.subr.mxu0 0.0
    %74 = vmatpush1.msra.mxu0 0.0
    %75 = vmatprep.subr.mxu0 0.0
    %76 = vmatpush1.msra.mxu0 0.0
    %77 = vmatprep.subr.mxu0 0.0
    %78 = vmatpush1.msra.mxu0 0.0
    %79 = vmatprep.subr.mxu0 0.0
    %80 = vmatpush1.msra.mxu0 0.0
    %81 = vmatprep.subr.mxu0 0.0
    %82 = vmatpush1.msra.mxu0 0.0
    %83 = vmatprep.subr.mxu0 0.0
    %84 = vmatpush1.msra.mxu0 0.0
    %85 = vmatprep.subr.mxu0 0.0
    %86 = vmatpush1.msra.mxu0 0.0
    %87 = vmatprep.subr.mxu0 0.0
    %88 = vmatpush1.msra.mxu0 0.0
    %89 = vmatprep.subr.mxu0 0.0
    %90 = vmatpush1.msra.mxu0 0.0
    %91 = vmatprep.subr.mxu0 0.0
    %92 = vmatpush1.msra.mxu0 0.0
    %93 = vmatprep.subr.mxu0 0.0
    %94 = vmatpush1.msra.mxu0 0.0
    %95 = vmatprep.subr.mxu0 0.0
    %96 = vmatpush1.msra.mxu0 0.0
    %97 = vmatprep.subr.mxu0 0.0
    %98 = vmatpush1.msra.mxu0 0.0
    %99 = vmatprep.subr.mxu0 0.0
    %100 = vmatpush1.msra.mxu0 0.0
    %101 = vmatprep.subr.mxu0 0.0
    %102 = vmatpush1.msra.mxu0 0.0
    %103 = vmatprep.subr.mxu0 0.0
    %104 = vmatpush1.msra.mxu0 0.0
    %105 = vmatprep.subr.mxu0 0.0
    %106 = vmatpush1.msra.mxu0 0.0
    %107 = vmatprep.subr.mxu0 0.0
    %108 = vmatpush1.msra.mxu0 0.0
    %109 = vmatprep.subr.mxu0 0.0
    %110 = vmatpush1.msra.mxu0 0.0
    %111 = vmatprep.subr.mxu0 0.0
    %112 = vmatpush1.msra.mxu0 0.0
    %113 = vmatprep.subr.mxu0 0.0
    %114 = vmatpush1.msra.mxu0 0.0
    %115 = vmatprep.subr.mxu0 0.0
    %116 = vmatpush1.msra.mxu0 0.0
    %117 = vmatprep.mubr.f32.mxu0 0.0
    %118 = vmatmul.mubr.f32.gmra.mrb[0].mxu0 %v45
    %v119 = vpop.f32.mrb[0].mxu0
    %v120 = vadd.f32 0.0, %v119
    %v121 = vpop.f32.mrb[0].mxu0
    %122 = vmatprep.mubr.f32.mxu0 0.0
    %123 = vmatmul.mubr.f32.gmra.mrb[0].mxu0 %v48
    %v124 = vpop.f32.mrb[0].mxu0
    %v125 = vadd.f32 0.0, %v124
    %v126 = vpop.f32.mrb[0].mxu0
    %127 = vmatprep.mubr.f32.mxu0 0.0
    %128 = vmatmul.mubr.f32.gmra.mrb[0].mxu0 %v51
    %v129 = vpop.f32.mrb[0].mxu0
    %v130 = vadd.f32 0.0, %v129
    %v131 = vpop.f32.mrb[0].mxu0
    %132 = vdwg.mxu0
    %v133 = vmul.f32 %v32, %v32
    %v134 = vsub.f32 %v32, 0.33
    %v135 = vmax.f32 %v134, 0.0
    %v136 = vmul.f32 %v135, %v135
    %v137 = vsub.f32 %v32, 0.66
    %v138 = vmax.f32 %v137, 0.0
    %v139 = vmul.f32 %v138, %v138
    %141 = vset.pattern.permute.xlu0 0
    %142 = vperm.xlu0 %141, %v40
    %v143 = vpop.permute.xlu0 %142
    %v145 = vadd.f32 %v120, %v143
    %v146 = vadd.f32 %v145, 0.0
    %v148 = vlaneseq
    %v149 = vshrl.u32 %v148, 7
    %v150 = vsub.s32 0, %v149
    %v151 = vrot.slane %v32, %v150
    %v153 = vmul.f32 %v151, %v145
    %v155 = vrot.slane %v153, 4
    %v157 = vadd.f32 %v146, %v155
    %159 = vset.pattern.permute.xlu0 0
    %160 = vperm.xlu0 %159, %v41
    %v161 = vpop.permute.xlu0 %160
    %v163 = vadd.f32 %v125, %v161
    %v165 = vlaneseq
    %v166 = vshrl.u32 %v165, 7
    %v167 = vsub.s32 0, %v166
    %v168 = vrot.slane %v133, %v167
    %v170 = vmul.f32 %v168, %v163
    %v171 = vadd.f32 %v157, %v170
    %v173 = vlaneseq
    %v174 = vshrl.u32 %v173, 7
    %v175 = vsub.s32 0, %v174
    %v176 = vrot.slane %v136, %v175
    %v178 = vmul.f32 %v176, %v163
    %v180 = vrot.slane %v178, 4
    %v182 = vadd.f32 %v171, %v180
    %184 = vset.pattern.permute.xlu0 0
    %185 = vperm.xlu0 %184, %v42
    %v186 = vpop.permute.xlu0 %185
    %v188 = vadd.f32 %v130, %v186
    %v190 = vlaneseq
    %v191 = vshrl.u32 %v190, 7
    %v192 = vsub.s32 0, %v191
    %v193 = vrot.slane %v139, %v192
    %v195 = vmul.f32 %v193, %v188
    %v196 = vadd.f32 %v182, %v195
    %v197 = vmul.f32 %v196, 0.5
    %v198 = vmax.f32 %v197, -3.0
    %v199 = vmin.f32 %v198, 3.0
    %v200 = vtanh.pop %v199
    %v201 = vmul.f32 %v200, 3.0
    %202 = vst [vmem:[#allocation5] sm:$0xf] %v201
    // Predicated region
    $region22: #{tpu_custom_call.1} parent=1 // pred_check
      _
    $region23: #{tpu_custom_call.1} parent=1 // pred_check_branch
      %204 = sbr.rel (0) target = $region25
    $region24: #{tpu_custom_call.1} parent=1 // pred_region
      %s206 = ssub.s32 64, 64
      %207 = vsyncadd [#allocation4], %s206
      %s209 = sshll.u32 [#allocation5], 4
      %s210 = int_to_ptr.vmem [resolvable:$true] %s209
      %212 = dma.vmem_to_hbm [thread:$0]  %s210, 64, %s4, [#allocation4]
    $region25: #{tpu_custom_call.1} parent=1 // pred_fallthru
      _
    // Predicated region
    $region26: #{tpu_custom_call.1} parent=1 // pred_check
      _
    $region27: #{tpu_custom_call.1} parent=1 // pred_check_branch
      %214 = sbr.rel (0) target = $region29
    $region28: #{tpu_custom_call.1} parent=1 // pred_region
      %215 = dma.done [#allocation4], 64
    $region29: #{tpu_custom_call.1} parent=1 // pred_fallthru
      _
    %216 = vsyncpa [#allocation3], 1
    %217 = vsyncpa [#allocation4], 1

</llo_original>
